<compile_context>
chip_gen: v7x
topology: tpu7x:2x2x1
jax: 0.10.0
libtpu: 0.0.40
codegen_flags: <defaults>
</compile_context>

<pallas_src>
import functools

import jax
import jax.numpy as jnp
from jax.experimental import pallas as pl
from jax.experimental.pallas import tpu as pltpu


_LANE = 128
_SUBLANE = 8
_MAX_COLS = 2048            # lane-dense wide last dim, in [128, 2048]


def _gmof_kernel(x_ref, o_ref, *, rho_sq: float):
    x = x_ref[...]
    c = jnp.asarray(rho_sq, x.dtype)
    # Same op order as the PyTorch module (exact division; kernel is DMA-bound,
    # not VALU/EUP-bound, so approx reciprocal buys nothing).
    o_ref[...] = c * (x / (x + c))


def _gmof_jnp(x, rho_sq):
    c = jnp.asarray(rho_sq, x.dtype)
    return c * (x / (x + c))


@functools.lru_cache(maxsize=1)
def _tpu_generation() -> int:
    """Best-effort TPU generation detection (for tile-size heuristics only)."""
    try:
        kind = jax.devices()[0].device_kind.lower()
    except Exception:  # pragma: no cover - never fatal, fall back conservative
        return 0
    if "v7" in kind or "7x" in kind:
        return 7
    if "v6" in kind or "v5p" in kind:   # v5p: large VMEM/HBM, treat like v6e
        return 6
    return 5


def _pick_cols(n: int, max_cols: int, sublane: int) -> int:
    """Largest multiple-of-128 divisor of n (n % 128 == 0), preferring widths
    that also leave >= `sublane` rows for better vreg packing."""
    caps = (min(max_cols, (n // sublane) // _LANE * _LANE), max_cols)
    for cap in caps:
        c = cap
        while c >= _LANE:
            if n % c == 0:
                return c
            c -= _LANE
    return 0


def _pick_tile_rows(rows, cols, itemsize, sublane, tile_bytes, min_steps):
    bytes_per_row = cols * itemsize
    # VMEM-budget cap, sublane aligned.
    cap = max(sublane, (tile_bytes // bytes_per_row) // sublane * sublane)

    if rows < min_steps * sublane:
        # Too small to split into `min_steps` aligned blocks: take the full row
        # extent in one block (block == full dim is always legal).
        return rows if rows * bytes_per_row <= 4 * tile_bytes else cap

    # Cap so we get >= min_steps grid steps (>= 2 per TC on v7x) so each core's
    # double buffer overlaps prefetch with writeback.
    cap = min(cap, max(sublane, (rows // min_steps) // sublane * sublane))

    # Prefer a tile that divides `rows` exactly (no masked edge block), but do
    # not shrink below half the cap for it.
    t = cap
    floor = max(sublane, cap // 2)
    while t >= floor:
        if rows % t == 0:
            return t
        t -= sublane
    return cap      # ragged last block, masked by Pallas


def gmof(residual: jax.Array, rho: float = 1.0) -> jax.Array:
    """Apply GMoF elementwise to `residual` (any shape)."""
    rho_sq = float(rho) ** 2
    orig_shape = residual.shape
    dtype = residual.dtype
    n = residual.size
    if n == 0:
        return residual

    itemsize = jnp.dtype(dtype).itemsize
    sublane = max(_SUBLANE, 32 // max(1, itemsize))   # 8 f32, 16 bf16, 32 int8

    flat = residual.reshape(-1)
    main_n = (n // _LANE) * _LANE
    if main_n == 0:
        # Tiny (< 128 elements): a kernel launch is pure overhead.
        return _gmof_jnp(flat, rho_sq).reshape(orig_shape)

    if main_n < n:
        # Ragged element count: process the biggest multiple-of-128 slab in the
        # kernel and handle the < 128-element tail with plain jnp. No jnp.pad /
        # out[:n] full-array round trips.
        x_main = flat[:main_n]
        tail = flat[main_n:]
    else:
        x_main = flat
        tail = None

    cols = _pick_cols(main_n, _MAX_COLS, sublane)     # >= 128 guaranteed
    rows = main_n // cols
    x2d = x_main.reshape(rows, cols)

    gen = _tpu_generation()
    tile_bytes = {7: 8 << 20, 6: 4 << 20}.get(gen, 2 << 20)
    min_steps = 4 if gen == 7 else 2                  # >= 2 steps per TC on v7x
    tile_rows = _pick_tile_rows(rows, cols, itemsize, sublane,
                                tile_bytes, min_steps)
    grid = (pl.cdiv(rows, tile_rows),)

    out2d = pl.pallas_call(
        functools.partial(_gmof_kernel, rho_sq=rho_sq),
        out_shape=jax.ShapeDtypeStruct((rows, cols), dtype),
        grid_spec=pltpu.PrefetchScalarGridSpec(
            num_scalar_prefetch=0,
            grid=grid,
            in_specs=[pl.BlockSpec((tile_rows, cols), lambda i: (i, 0))],
            out_specs=pl.BlockSpec((tile_rows, cols), lambda i: (i, 0)),
        ),
        compiler_params=pltpu.CompilerParams(
            dimension_semantics=("parallel",),
            # 2x(in+out) double buffering of one tile, with headroom; stays
            # inside physical VMEM on all generations (64 MiB on v7x).
            vmem_limit_bytes=min(4 * tile_bytes + (8 << 20), 64 << 20),
        ),
        cost_estimate=pl.CostEstimate(
            flops=3 * main_n,
            bytes_accessed=2 * main_n * itemsize,
            transcendentals=0),
    )(x2d)

    out_flat = out2d.reshape(-1)
    if tail is not None:
        out_flat = jnp.concatenate([out_flat, _gmof_jnp(tail, rho_sq)])
    return out_flat.reshape(orig_shape)


def gmof_ref(residual, rho=1.0):
    rho_sq = rho ** 2
    dist = residual / (residual + rho_sq)
    return rho_sq * dist


if __name__ == "__main__":
    key = jax.random.PRNGKey(0)
    rho = 1.0  # matches GMoF default __init__ arg

    k1, k2, k3, k4 = jax.random.split(key, 4)

    # 1) Small NCHW residual, consistent with typical module usage.
    x = jax.random.uniform(k1, (2, 4, 16, 16), dtype=jnp.float32,
                           minval=0.0, maxval=4.0)
    out = jax.block_until_ready(gmof(x, rho=rho))
    assert out.shape == x.shape and out.dtype == x.dtype
    assert jnp.allclose(out, gmof_ref(x, rho=rho), rtol=1e-6, atol=1e-6)

    # 2) Larger input to exercise the multi-block (grid >= 2) path.
    x2 = jax.random.uniform(k2, (4, 8, 64, 64), dtype=jnp.float32,
                            minval=0.0, maxval=4.0)
    out2 = jax.block_until_ready(gmof(x2, rho=rho))
    assert jnp.allclose(out2, gmof_ref(x2, rho=rho), rtol=1e-6, atol=1e-6)

    # 3) Ragged element count: main slab kernel + jnp tail (no pad/slice).
    x3 = jax.random.uniform(k3, (3, 5, 7, 11), dtype=jnp.float32,
                            minval=0.0, maxval=4.0)
    out3 = jax.block_until_ready(gmof(x3, rho=rho))
    assert out3.shape == x3.shape
    assert jnp.allclose(out3, gmof_ref(x3, rho=rho), rtol=1e-6, atol=1e-6)

    # 4) bf16 residual: exercises dtype-aware (16-row) sublane rounding.
    x4 = jax.random.uniform(k4, (2, 4, 32, 64), dtype=jnp.float32,
                            minval=0.0, maxval=4.0).astype(jnp.bfloat16)
    out4 = jax.block_until_ready(gmof(x4, rho=rho))
    assert out4.shape == x4.shape and out4.dtype == x4.dtype
    assert jnp.allclose(out4.astype(jnp.float32),
                        gmof_ref(x4.astype(jnp.float32), rho=rho),
                        rtol=2e-2, atol=2e-2)

    print("KERNEL_OK")
</pallas_src>

<mosaic_0001>
module attributes {stable_mosaic.version = 11 : i64} {
  func.func @_gmof_kernel(%arg0: i32, %arg1: memref<8x256xf32, #tpu.memory_space<vmem>>, %arg2: memref<8x256xf32, #tpu.memory_space<vmem>>) attributes {dimension_semantics = [#tpu.dimension_semantics<parallel>], iteration_bounds = array<i64: 1>, scalar_prefetch = 0 : i64, scratch_operands = 0 : i64, tpu.core_type = #tpu.core_type<tc>, window_params = [{transform_indices = @transform_0, window_bounds = array<i64: 8, 256>}, {transform_indices = @transform_1, window_bounds = array<i64: 8, 256>}]} {
    %c0 = arith.constant 0 : index
    %c0_0 = arith.constant 0 : index
    %0 = vector.load %arg1[%c0, %c0_0] : memref<8x256xf32, #tpu.memory_space<vmem>>, vector<8x256xf32>
    %cst = arith.constant 1.000000e+00 : f32
    %1 = vector.broadcast %cst : f32 to vector<8x256xf32>
    %2 = arith.addf %0, %1 : vector<8x256xf32>
    %3 = arith.divf %0, %2 : vector<8x256xf32>
    %cst_1 = arith.constant 1.000000e+00 : f32
    %4 = vector.broadcast %cst_1 : f32 to vector<8x256xf32>
    %5 = arith.mulf %4, %3 : vector<8x256xf32>
    %c0_2 = arith.constant 0 : index
    %c0_3 = arith.constant 0 : index
    %6 = vector.load %arg2[%c0_2, %c0_3] : memref<8x256xf32, #tpu.memory_space<vmem>>, vector<8x256xf32>
    tpu.vector_store %arg2[%c0_2, %c0_3], %5 {strides = array<i32>} : memref<8x256xf32, #tpu.memory_space<vmem>>, vector<8x256xf32>,
    return
  }
  func.func @transform_0(%arg0: i32) -> (i32, i32) {
    %c0_i32 = arith.constant 0 : i32
    %c0_i32_0 = arith.constant 0 : i32
    return %arg0, %c0_i32 : i32, i32
  }
  func.func @transform_1(%arg0: i32) -> (i32, i32) {
    %c0_i32 = arith.constant 0 : i32
    %c0_i32_0 = arith.constant 0 : i32
    return %arg0, %c0_i32 : i32, i32
  }
}

</mosaic_0001>

<llo_original>
// kernel: tpu_custom_call.1
$region0: #{tpu_custom_call.1}
  #allocation0 [shape = 'u32[]', space=smem, size = 0x4, offset = 0x4, fixed_abs, tag = 'smem constant byte address 0x4 - core index']
  #allocation1 [shape = 'u32[144,128]{1,0:T(1,128)}', space=vmem, size = 0x12000, scoped, tag = 'internal scratch']
  %s0 = inlined_call_operand.hbm [shape: f32[8,256], index: 0, kind: input, shape index: {}]
  %s1 = inlined_call_operand.hbm [shape: f32[8,256], index: 1, kind: output, shape index: {}]
  %s2 = sld [smem:[#allocation0]]
  $region18: #{tpu_custom_call.1} parent=0
    _
  %s4 = ssub.s32 1, %s2
  %s5 = scalar_select 0, %s4, %s2
  $region1: #{tpu_custom_call.1} parent=0
    #allocation2 [shape = 'u8[8192]{0}', space=vmem, size = 0x2000, scoped, tag = 'input window, operand 0, single buffered']
    #allocation3 [shape = 's32[1]{0}', space=sflag, size = 0x4, scoped, tag = 'scoped memory for tpu_custom_call.1']
    #allocation4 [shape = 's32[1]{0}', space=sflag, size = 0x4, scoped, tag = 'scoped memory for tpu_custom_call.1']
    #allocation5 [shape = 'u8[8192]{0}', space=vmem, size = 0x2000, scoped, tag = 'output window, operand 0, single buffered']
    %6 = vsyncpa [#allocation3], 0
    %7 = vsyncpa [#allocation4], 0
    // Predicated region
    $region2: #{tpu_custom_call.1} parent=1 // pred_check
      _
    $region3: #{tpu_custom_call.1} parent=1 // pred_check_branch
      %9 = sbr.rel (0) target = $region5
    $region4: #{tpu_custom_call.1} parent=1 // pred_region
      %s11 = ssub.s32 256, 256
      %12 = vsyncadd [#allocation3], %s11
      %s14 = sshll.u32 [#allocation2], 4
      %s15 = int_to_ptr.vmem [resolvable:$true] %s14
      %17 = dma.hbm_to_vmem [thread:$0]  %s0, 256, %s15, [#allocation3]
    $region5: #{tpu_custom_call.1} parent=1 // pred_fallthru
      _
    // Predicated region
    $region6: #{tpu_custom_call.1} parent=1 // pred_check
      _
    $region7: #{tpu_custom_call.1} parent=1 // pred_check_branch
      %19 = sbr.rel (0) target = $region9
    $region8: #{tpu_custom_call.1} parent=1 // pred_region
      %20 = dma.done [#allocation3], 256
    $region9: #{tpu_custom_call.1} parent=1 // pred_fallthru
      _
    %v21 = vld [vmem:[#allocation2] sm:$0xff]
    %v22 = vld [vmem:[#allocation2 + $0x8] sm:$0xff]
    %v23 = vadd.f32 %v21, 1.0
    %v24 = vadd.f32 %v22, 1.0
    %v25 = vrcp.pop %v23
    %v26 = vmul.f32 %v21, %v25
    %v27 = vrcp.pop %v24
    %v28 = vmul.f32 %v22, %v27
    %29 = vst [vmem:[#allocation5] sm:$0xff] %v26
    %30 = vst [vmem:[#allocation5 + $0x8] sm:$0xff] %v28
    // Predicated region
    $region10: #{tpu_custom_call.1} parent=1 // pred_check
      _
    $region11: #{tpu_custom_call.1} parent=1 // pred_check_branch
      %32 = sbr.rel (0) target = $region13
    $region12: #{tpu_custom_call.1} parent=1 // pred_region
      %s34 = ssub.s32 256, 256
      %35 = vsyncadd [#allocation4], %s34
      %s37 = sshll.u32 [#allocation5], 4
      %s38 = int_to_ptr.vmem [resolvable:$true] %s37
      %40 = dma.vmem_to_hbm [thread:$0]  %s38, 256, %s1, [#allocation4]
    $region13: #{tpu_custom_call.1} parent=1 // pred_fallthru
      _
    // Predicated region
    $region14: #{tpu_custom_call.1} parent=1 // pred_check
      _
    $region15: #{tpu_custom_call.1} parent=1 // pred_check_branch
      %42 = sbr.rel (0) target = $region17
    $region16: #{tpu_custom_call.1} parent=1 // pred_region
      %43 = dma.done [#allocation4], 256
    $region17: #{tpu_custom_call.1} parent=1 // pred_fallthru
      _
    %44 = vsyncpa [#allocation3], 1
    %45 = vsyncpa [#allocation4], 1

</llo_original>
